<compile_context>
chip_gen: v7x
topology: tpu7x:2x2x1
jax: 0.10.0
libtpu: 0.0.40
codegen_flags: <defaults>
</compile_context>

<pallas_src>
import math

import jax
import jax.numpy as jnp
from jax.experimental import pallas as pl
from jax.experimental.pallas import tpu as pltpu


# ----------------------------- kernels ---------------------------------------
# Ref shapes inside the kernel (head dim squeezed out by the BlockSpec):
#   x_ref: (TB, TK)   w_ref: (TK, TO)   b_ref: (1, TO)   o_ref: (TB, TO)
# Grid: (H, batch tiles, output tiles, K tiles); K innermost ("arbitrary").


def _mhl_bias_f32(x_ref, w_ref, b_ref, o_ref):
    """float32 output: accumulate directly into the K-resident output block."""
    k = pl.program_id(3)
    part = jnp.dot(x_ref[...], w_ref[...], preferred_element_type=jnp.float32)

    @pl.when(k == 0)
    def _():
        # Seed with the bias -> no zero-init pass and no epilogue add.
        o_ref[...] = part + b_ref[...].astype(jnp.float32)

    @pl.when(k != 0)
    def _():
        o_ref[...] += part


def _mhl_nobias_f32(x_ref, w_ref, o_ref):
    k = pl.program_id(3)
    part = jnp.dot(x_ref[...], w_ref[...], preferred_element_type=jnp.float32)

    @pl.when(k == 0)
    def _():
        o_ref[...] = part

    @pl.when(k != 0)
    def _():
        o_ref[...] += part


def _mhl_bias_acc(x_ref, w_ref, b_ref, o_ref, acc_ref):
    """Non-f32 output: f32 VMEM scratch accumulator, single cast at k==last."""
    k = pl.program_id(3)
    part = jnp.dot(x_ref[...], w_ref[...], preferred_element_type=jnp.float32)

    @pl.when(k == 0)
    def _():
        acc_ref[...] = part + b_ref[...].astype(jnp.float32)

    @pl.when(k != 0)
    def _():
        acc_ref[...] += part

    @pl.when(k == pl.num_programs(3) - 1)
    def _():
        o_ref[...] = acc_ref[...].astype(o_ref.dtype)


def _mhl_nobias_acc(x_ref, w_ref, o_ref, acc_ref):
    k = pl.program_id(3)
    part = jnp.dot(x_ref[...], w_ref[...], preferred_element_type=jnp.float32)

    @pl.when(k == 0)
    def _():
        acc_ref[...] = part

    @pl.when(k != 0)
    def _():
        acc_ref[...] += part

    @pl.when(k == pl.num_programs(3) - 1)
    def _():
        o_ref[...] = acc_ref[...].astype(o_ref.dtype)


# ----------------------------- tiling helpers --------------------------------


def _round_up(n, m):
    return ((n + m - 1) // m) * m


def _sublane(dtype):
    # Minimum sublane granularity per dtype width (f32: 8, bf16: 16, int8/fp8: 32).
    return {4: 8, 2: 16, 1: 32}.get(jnp.dtype(dtype).itemsize, 8)


def _device_config():
    """Generation-aware VMEM budgets (v5e/v6e: 128 MiB, 1 TC; v7x: 64 MiB, 2 TCs)."""
    try:
        vmem = int(pltpu.get_tpu_info().vmem_capacity_bytes)
    except Exception:  # pragma: no cover - conservative fallback
        vmem = 128 * 1024 * 1024
    if vmem >= 100 * 1024 * 1024:  # v5e / v6e
        return dict(tile_budget=64 << 20, vmem_limit=96 << 20,
                    tk_cap=2048, to_cap=1024, tb_cap=1024, multi_core=False)
    # v7x-like: 64 MiB physical VMEM, 2 TensorCores per chip.
    return dict(tile_budget=24 << 20, vmem_limit=44 << 20,
                tk_cap=1024, to_cap=512, tb_cap=512, multi_core=True)


def _pick_lane_tile_min_pad(dim, cap):
    """Padding-aware lane tile (multiple of 128): minimise round_up(dim, t);
    tie-break on the largest t (fewest tiles)."""
    full = _round_up(dim, 128)
    if full <= cap:
        return full
    best_t, best_pad = 128, _round_up(dim, 128)
    t = 256
    while t <= cap:
        pad = _round_up(dim, t)
        if pad < best_pad or (pad == best_pad and t > best_t):
            best_pad, best_t = pad, t
        t += 128
    return best_t


def _pick_lane_tile_balanced(dim, cap):
    """Fewest K steps first (multiple of 128), balanced to minimise padding."""
    full = _round_up(dim, 128)
    if full <= cap:
        return full
    n = -(-full // cap)
    return _round_up(-(-dim // n), 128)


def _pick_batch_tile(b, sub, cap):
    """Whole batch in one tile when it fits (Bp/TB == 1 -> weights streamed
    exactly once); otherwise the fewest, balanced tiles."""
    full = _round_up(b, sub)
    if full <= cap:
        return full
    n = -(-full // cap)
    return _round_up(-(-b // n), sub)


# ----------------------------- module wrapper --------------------------------


class MultiHeadLinearPallas:
    """Pallas-TPU MultiHeadLinear.

    weight: (H, O, I); bias: (H, 1, O) or None.
    __call__(x: (H, B, I)) -> (H, B, O)   ==   bmm(x, weight^T) (+ bias)

    The weight transpose to (H, I, O) and the tile padding happen ONCE in the
    constructor (parameter prep), not in the forward path.
    """

    def __init__(self, weight, bias=None, *, compute_dtype=None):
        H, O, I = weight.shape
        if bias is not None:
            assert bias.shape == (H, 1, O)
        self.H, self.O, self.I = H, O, I
        self.cfg = _device_config()
        self.compute_dtype = None if compute_dtype is None else jnp.dtype(compute_dtype)

        self.TO = _pick_lane_tile_min_pad(O, max(self.cfg["to_cap"], 128))
        self.TK = _pick_lane_tile_balanced(I, max(self.cfg["tk_cap"], 128))
        self.Op = _round_up(O, self.TO)
        self.Ip = _round_up(I, self.TK)

        w_dtype = self.compute_dtype if self.compute_dtype is not None else weight.dtype
        wT = jnp.swapaxes(weight, 1, 2).astype(w_dtype)  # (H, I, O), MXU-natural
        if (self.Ip, self.Op) != (I, O):
            wT = jnp.pad(wT, ((0, 0), (0, self.Ip - I), (0, self.Op - O)))
        self.wT = wT

        self.bias = None
        if bias is not None:
            b = bias
            if self.Op != O:
                b = jnp.pad(b, ((0, 0), (0, 0), (0, self.Op - O)))
            self.bias = b

    def __call__(self, x):
        H, B, I = x.shape
        assert H == self.H and I == self.I
        out_dtype = jnp.dtype(x.dtype)
        if self.compute_dtype is not None:
            x = x.astype(self.compute_dtype)

        cfg = self.cfg
        TK, TO, Op, Ip = self.TK, self.TO, self.Op, self.Ip
        x_isz = jnp.dtype(x.dtype).itemsize
        w_isz = jnp.dtype(self.wT.dtype).itemsize
        o_isz = out_dtype.itemsize
        b_isz = jnp.dtype(self.bias.dtype).itemsize if self.bias is not None else 0
        use_scratch = out_dtype != jnp.dtype(jnp.float32)

        sub = max(_sublane(x.dtype), _sublane(out_dtype))

        # Largest batch tile whose double-buffered footprint fits the budget.
        const = 2 * TK * TO * w_isz + 2 * TO * b_isz
        per_row = 2 * (TK * x_isz + TO * o_isz) + (4 * TO if use_scratch else 0)
        tb_fit = (cfg["tile_budget"] - const) // per_row
        tb_fit = max(sub, (tb_fit // sub) * sub)
        TB = _pick_batch_tile(B, sub, max(sub, min(cfg["tb_cap"], tb_fit)))
        Bp = _round_up(B, TB)

        # On dual-TensorCore chips make sure there are >= 2 parallel blocks.
        if cfg["multi_core"] and H * (Bp // TB) * (Op // TO) < 2:
            if _round_up(B, sub) >= 2 * sub:
                TB = _round_up(-(-B // 2), sub)
                Bp = _round_up(B, TB)
            elif TO % 256 == 0:
                TO = TO // 2  # still divides Op

        if (Bp, Ip) != (B, I):
            x = jnp.pad(x, ((0, 0), (0, Bp - B), (0, Ip - I)))

        grid = (H, Bp // TB, Op // TO, Ip // TK)

        x_spec = pl.BlockSpec((None, TB, TK), lambda h, i, j, k: (h, i, k))
        w_spec = pl.BlockSpec((None, TK, TO), lambda h, i, j, k: (h, k, j))
        o_spec = pl.BlockSpec((None, TB, TO), lambda h, i, j, k: (h, i, j))
        b_spec = pl.BlockSpec((None, 1, TO), lambda h, i, j, k: (h, 0, j))

        if self.bias is not None:
            kernel = _mhl_bias_acc if use_scratch else _mhl_bias_f32
            in_specs = [x_spec, w_spec, b_spec]
            operands = (x, self.wT, self.bias)
        else:
            kernel = _mhl_nobias_acc if use_scratch else _mhl_nobias_f32
            in_specs = [x_spec, w_spec]
            operands = (x, self.wT)

        scratch_shapes = [pltpu.VMEM((TB, TO), jnp.float32)] if use_scratch else []

        out = pl.pallas_call(
            kernel,
            out_shape=jax.ShapeDtypeStruct((H, Bp, Op), out_dtype),
            grid_spec=pltpu.PrefetchScalarGridSpec(
                num_scalar_prefetch=0,
                grid=grid,
                in_specs=in_specs,
                out_specs=o_spec,
                scratch_shapes=scratch_shapes,
            ),
            compiler_params=pltpu.CompilerParams(
                dimension_semantics=("parallel", "parallel", "parallel", "arbitrary"),
                vmem_limit_bytes=cfg["vmem_limit"],
            ),
        )(*operands)

        if (Bp, Op) != (B, self.O):
            out = out[:, :B, :self.O]
        return out


def multi_head_linear(x, weight, bias=None, *, compute_dtype=None):
    """One-shot functional form. For repeated forward calls, construct
    MultiHeadLinearPallas once so the weight transpose/pad stays out of the
    per-call path."""
    return MultiHeadLinearPallas(weight, bias, compute_dtype=compute_dtype)(x)


# ----------------------------- init / demo -----------------------------------


def init_params(key, head_num, output_size, input_size, add_bias=True,
                dtype=jnp.float32):
    """Matches nn.init.uniform_(-a, a), a = sqrt(1 / input_size)."""
    a = math.sqrt(1.0 / input_size)
    kw, kb = jax.random.split(key)
    weight = jax.random.uniform(
        kw, (head_num, output_size, input_size), dtype=dtype, minval=-a, maxval=a)
    bias = None
    if add_bias:
        bias = jax.random.uniform(
            kb, (head_num, 1, output_size), dtype=dtype, minval=-a, maxval=a)
    return weight, bias


if __name__ == "__main__":
    head_num, batch, input_size, output_size = 4, 8, 32, 16

    key = jax.random.PRNGKey(0)
    kx, kp = jax.random.split(key)
    x = jax.random.normal(kx, (head_num, batch, input_size), dtype=jnp.float32)
    weight, bias = init_params(kp, head_num, output_size, input_size, add_bias=True)

    # Module-style use: weight transpose/pad happens ONCE here (hoisted prep).
    mhl = MultiHeadLinearPallas(weight, bias)
    y = jax.block_until_ready(mhl(x))
    y_ref = jnp.einsum("hbi,hoi->hbo", x, weight) + bias
    assert y.shape == (head_num, batch, output_size)
    assert jnp.allclose(y, y_ref, atol=1e-5, rtol=1e-5), "mismatch (bias, f32)"

    # No-bias variant (direct f32 accumulation into the output block).
    mhl_nb = MultiHeadLinearPallas(weight, None)
    y_nb = jax.block_until_ready(mhl_nb(x))
    y_nb_ref = jnp.einsum("hbi,hoi->hbo", x, weight)
    assert jnp.allclose(y_nb, y_nb_ref, atol=1e-5, rtol=1e-5), "mismatch (no bias, f32)"

    # bf16 path exercises the f32-scratch accumulator kernel variant.
    xb = x.astype(jnp.bfloat16)
    wb = weight.astype(jnp.bfloat16)
    bb = bias.astype(jnp.bfloat16)
    mhl_bf = MultiHeadLinearPallas(wb, bb)
    y_bf = jax.block_until_ready(mhl_bf(xb))
    y_bf_ref = (jnp.einsum("hbi,hoi->hbo", xb.astype(jnp.float32),
                           wb.astype(jnp.float32))
                + bb.astype(jnp.float32))
    assert y_bf.shape == (head_num, batch, output_size)
    assert jnp.allclose(y_bf.astype(jnp.float32), y_bf_ref, atol=5e-2, rtol=5e-2), \
        "mismatch (bias, bf16)"

    print("KERNEL_OK")
</pallas_src>

<mosaic_0001>
module attributes {stable_mosaic.version = 11 : i64} {
  func.func @_mhl_bias_f32(%arg0: i32, %arg1: i32, %arg2: i32, %arg3: i32, %arg4: memref<1x8x128xf32, #tpu.memory_space<vmem>>, %arg5: memref<1x128x128xf32, #tpu.memory_space<vmem>>, %arg6: memref<1x1x128xf32, #tpu.memory_space<vmem>>, %arg7: memref<1x8x128xf32, #tpu.memory_space<vmem>>) attributes {dimension_semantics = [#tpu.dimension_semantics<parallel>, #tpu.dimension_semantics<parallel>, #tpu.dimension_semantics<parallel>, #tpu.dimension_semantics<arbitrary>], iteration_bounds = array<i64: 4, 1, 1, 1>, scalar_prefetch = 0 : i64, scratch_operands = 0 : i64, tpu.core_type = #tpu.core_type<tc>, window_params = [{transform_indices = @transform_0, window_bounds = array<i64: 1, 8, 128>}, {transform_indices = @transform_1, window_bounds = array<i64: 1, 128, 128>}, {transform_indices = @transform_2, window_bounds = array<i64: 1, 1, 128>}, {transform_indices = @transform_3, window_bounds = array<i64: 1, 8, 128>}]} {
    %c0 = arith.constant 0 : index
    %c0_0 = arith.constant 0 : index
    %c0_1 = arith.constant 0 : index
    %0 = vector.load %arg4[%c0, %c0_0, %c0_1] : memref<1x8x128xf32, #tpu.memory_space<vmem>>, vector<1x8x128xf32>
    %1 = vector.shape_cast %0 : vector<1x8x128xf32> to vector<8x128xf32>
    %c0_2 = arith.constant 0 : index
    %c0_3 = arith.constant 0 : index
    %c0_4 = arith.constant 0 : index
    %2 = vector.load %arg5[%c0_2, %c0_3, %c0_4] : memref<1x128x128xf32, #tpu.memory_space<vmem>>, vector<1x128x128xf32>
    %3 = vector.shape_cast %2 : vector<1x128x128xf32> to vector<128x128xf32>
    %cst = arith.constant dense<0.000000e+00> : vector<8x128xf32>
    %4 = tpu.matmul %1, %3, %cst {dimension_numbers = #tpu.dot_dimension_numbers<[1], [0], [0], [1], [0, 0, 1, 1], [], []>} : vector<8x128xf32>, vector<128x128xf32>, vector<8x128xf32> -> vector<8x128xf32>
    %c0_i32 = arith.constant 0 : i32
    %5 = arith.cmpi eq, %arg3, %c0_i32 : i32
    %6 = arith.extui %5 : i1 to i32
    %c0_i32_5 = arith.constant 0 : i32
    %7 = arith.cmpi ne, %6, %c0_i32_5 : i32
    scf.if %7 {
      %c0_8 = arith.constant 0 : index
      %c0_9 = arith.constant 0 : index
      %c0_10 = arith.constant 0 : index
      %11 = vector.load %arg6[%c0_8, %c0_9, %c0_10] : memref<1x1x128xf32, #tpu.memory_space<vmem>>, vector<1x1x128xf32>
      %12 = vector.shape_cast %11 : vector<1x1x128xf32> to vector<1x128xf32>
      %13 = vector.broadcast %12 : vector<1x128xf32> to vector<8x128xf32>
      %14 = arith.addf %4, %13 : vector<8x128xf32>
      %c0_11 = arith.constant 0 : index
      %c0_12 = arith.constant 0 : index
      %c0_13 = arith.constant 0 : index
      %15 = vector.load %arg7[%c0_11, %c0_12, %c0_13] : memref<1x8x128xf32, #tpu.memory_space<vmem>>, vector<1x8x128xf32>
      %16 = vector.shape_cast %15 : vector<1x8x128xf32> to vector<8x128xf32>
      %17 = vector.shape_cast %14 : vector<8x128xf32> to vector<1x8x128xf32>
      tpu.vector_store %arg7[%c0_11, %c0_12, %c0_13], %17 {strides = array<i32>} : memref<1x8x128xf32, #tpu.memory_space<vmem>>, vector<1x8x128xf32>,
    } else {
    }
    %c0_i32_6 = arith.constant 0 : i32
    %8 = arith.cmpi ne, %arg3, %c0_i32_6 : i32
    %9 = arith.extui %8 : i1 to i32
    %c0_i32_7 = arith.constant 0 : i32
    %10 = arith.cmpi ne, %9, %c0_i32_7 : i32
    scf.if %10 {
      %c0_8 = arith.constant 0 : index
      %c0_9 = arith.constant 0 : index
      %c0_10 = arith.constant 0 : index
      %11 = vector.load %arg7[%c0_8, %c0_9, %c0_10] : memref<1x8x128xf32, #tpu.memory_space<vmem>>, vector<1x8x128xf32>
      %12 = vector.shape_cast %11 : vector<1x8x128xf32> to vector<8x128xf32>
      %13 = arith.addf %12, %4 : vector<8x128xf32>
      %c0_11 = arith.constant 0 : index
      %c0_12 = arith.constant 0 : index
      %c0_13 = arith.constant 0 : index
      %14 = vector.load %arg7[%c0_11, %c0_12, %c0_13] : memref<1x8x128xf32, #tpu.memory_space<vmem>>, vector<1x8x128xf32>
      %15 = vector.shape_cast %14 : vector<1x8x128xf32> to vector<8x128xf32>
      %16 = vector.shape_cast %13 : vector<8x128xf32> to vector<1x8x128xf32>
      tpu.vector_store %arg7[%c0_11, %c0_12, %c0_13], %16 {strides = array<i32>} : memref<1x8x128xf32, #tpu.memory_space<vmem>>, vector<1x8x128xf32>,
    } else {
    }
    return
  }
  func.func @transform_0(%arg0: i32, %arg1: i32, %arg2: i32, %arg3: i32) -> (i32, i32, i32) {
    %c0_i32 = arith.constant 0 : i32
    return %arg0, %arg1, %arg3 : i32, i32, i32
  }
  func.func @transform_1(%arg0: i32, %arg1: i32, %arg2: i32, %arg3: i32) -> (i32, i32, i32) {
    %c0_i32 = arith.constant 0 : i32
    return %arg0, %arg3, %arg2 : i32, i32, i32
  }
  func.func @transform_2(%arg0: i32, %arg1: i32, %arg2: i32, %arg3: i32) -> (i32, i32, i32) {
    %c0_i32 = arith.constant 0 : i32
    %c0_i32_0 = arith.constant 0 : i32
    return %arg0, %c0_i32, %arg2 : i32, i32, i32
  }
  func.func @transform_3(%arg0: i32, %arg1: i32, %arg2: i32, %arg3: i32) -> (i32, i32, i32) {
    %c0_i32 = arith.constant 0 : i32
    return %arg0, %arg1, %arg2 : i32, i32, i32
  }
}

</mosaic_0001>

<llo_original>
// kernel: tpu_custom_call.1
$region0: #{tpu_custom_call.1}
  #allocation0 [shape = 'u32[]', space=smem, size = 0x4, offset = 0x4, fixed_abs, tag = 'smem constant byte address 0x4 - core index']
  #allocation1 [shape = 'u32[144,128]{1,0:T(1,128)}', space=vmem, size = 0x12000, scoped, tag = 'internal scratch']
  %s0 = inlined_call_operand.hbm [shape: f32[4,8,128], index: 0, kind: input, shape index: {}]
  %s1 = inlined_call_operand.hbm [shape: f32[4,128,128], index: 1, kind: input, shape index: {}]
  %s2 = inlined_call_operand.hbm [shape: f32[4,1,128], index: 2, kind: input, shape index: {}]
  %s3 = inlined_call_operand.hbm [shape: f32[4,8,128], index: 3, kind: output, shape index: {}]
  %s4 = sld [smem:[#allocation0]]
  $region65: #{tpu_custom_call.1} parent=0
    _
  %s6 = ssub.s32 1, %s4
  %s7 = scalar_select 0, %s6, %s4
  $region1: #{tpu_custom_call.1} parent=0
    #allocation2 [shape = 'u8[8192]{0}', space=vmem, size = 0x2000, scoped, tag = 'input window, operand 0']
    #allocation3 [shape = 's32[2]{0}', space=sflag, size = 0x8, scoped, tag = 'scoped memory for tpu_custom_call.1']
    #allocation4 [shape = 's32[2]{0}', space=sflag, size = 0x8, scoped, tag = 'scoped memory for tpu_custom_call.1']
    #allocation5 [shape = 'u8[131072]{0}', space=vmem, size = 0x20000, scoped, tag = 'input window, operand 1']
    #allocation6 [shape = 's32[2]{0}', space=sflag, size = 0x8, scoped, tag = 'scoped memory for tpu_custom_call.1']
    #allocation7 [shape = 'u8[1024]{0}', space=vmem, size = 0x400, scoped, tag = 'input window, operand 2']
    #allocation8 [shape = 'u8[8192]{0}', space=vmem, size = 0x2000, scoped, tag = 'output window, operand 0']
    %8 = vsyncpa [#allocation3], 0
    %s9 = scalar_lea.sflag [#allocation3], 1
    %10 = vsyncpa %s9, 0
    %11 = vsyncpa [#allocation6], 0
    %s12 = scalar_lea.sflag [#allocation6], 1
    %13 = vsyncpa %s12, 0
    %14 = vsyncpa [#allocation4], 0
    %s15 = scalar_lea.sflag [#allocation4], 1
    %16 = vsyncpa %s15, 0
    loop: start=0, step=1, limit=6
    $region2: #{tpu_custom_call.1} parent=1 // loop_pre_header
      _
    $region3: #{tpu_custom_call.1} parent=1 // loop_header
      %s18 = sphi 0, %s22
      %p19 = scmp.ge.s32.totalorder %s18, 6
      %s25 = sphi 0, %s51
      %s26 = sphi 0, %s47
      %s27 = sphi 0, %s43
      %s28 = sphi 0, %s39
      %s29 = sphi 0, %s25
      %s30 = sphi 0, %s26
      %s31 = sphi 0, %s27
      %s32 = sphi 0, %s28
      %s33 = sphi 0, %s29
      %s34 = sphi 0, %s30
      %s35 = sphi 0, %s31
      %s36 = sphi 0, %s32
      %s58 = sphi 0, %s60
      %s61 = sphi 0, %s58
      %s62 = sphi 0, %s61
      %s78 = sphi 0, %s62
      %s88 = sphi 0, %s90
      %s91 = sphi 0, %s88
      %s92 = sphi 0, %s91
      %s108 = sphi 0, %s92
      %s116 = sphi 0, %s118
      %s119 = sphi 0, %s116
      %s120 = sphi 0, %s119
      %s136 = sphi 0, %s120
      %s146 = sphi 0, %s148
      %s149 = sphi 0, %s146
      %s150 = sphi 0, %s149
      %s166 = sphi 0, %s150
    $region4: #{tpu_custom_call.1} parent=1 // loop_header_branch
      %21 = sbr.rel (%p19) target = $region8
    $region5: #{tpu_custom_call.1} parent=1 // loop_body
      %s23 = ssub.s32 %s18, 1
      %s24 = ssub.s32 %s18, 2
      %s37 = sadd.s32 1, %s28
      %p38 = scmp.ge.s32.totalorder %s37, 1
      %s39 = scalar_select %p38, 0, %s37
      %s40 = sadd.s32 1, %s27
      %s41 = scalar_select %p38, %s40, %s27
      %p42 = scmp.ge.s32.totalorder %s41, 1
      %s43 = scalar_select %p42, 0, %s41
      %s44 = sadd.s32 1, %s26
      %s45 = scalar_select %p42, %s44, %s26
      %p46 = scmp.ge.s32.totalorder %s45, 1
      %s47 = scalar_select %p46, 0, %s45
      %s48 = sadd.s32 1, %s25
      %s49 = scalar_select %p46, %s48, %s25
      %p50 = scmp.ge.s32.totalorder %s49, 4
      %s51 = scalar_select %p50, 0, %s49
      %s52 = ssub.s32 %s25, %s51
      %s53 = ssub.s32 %s26, %s47
      %s54 = sor.u32 %s52, %s53
      %s55 = ssub.s32 %s28, %s39
      %s56 = sor.u32 %s54, %s55
      %p57 = scmp.eq.s32.totalorder %s56, 0
      %s59 = sadd.s32 %s58, 1
      %s60 = scalar_select %p57, %s58, %s59
      %p63 = pneg %p57
      %p64 = scmp.eq.s32.totalorder %s18, 3
      %p65 = por %p63, %p64
      %p66 = scmp.ne.s32.totalorder %s58, %s61
      %p67 = scmp.eq.s32.totalorder %s18, 0
      %p68 = por %p66, %p67
      %p69 = scmp.ne.s32.totalorder %s58, %s61
      %p70 = scmp.eq.s32.totalorder %s23, 3
      %p71 = por %p69, %p70
      %p72 = scmp.ne.s32.totalorder %s61, %s62
      %p73 = scmp.eq.s32.totalorder %s23, 0
      %p74 = por %p72, %p73
      %p75 = scmp.ne.s32.totalorder %s61, %s62
      %p76 = scmp.eq.s32.totalorder %s24, 3
      %p77 = por %p75, %p76
      %p79 = scmp.ne.s32.totalorder %s62, %s78
      %p80 = scmp.eq.s32.totalorder %s24, 0
      %p81 = por %p79, %p80
      %s82 = ssub.s32 %s25, %s51
      %s83 = ssub.s32 %s28, %s39
      %s84 = sor.u32 %s82, %s83
      %s85 = ssub.s32 %s27, %s43
      %s86 = sor.u32 %s84, %s85
      %p87 = scmp.eq.s32.totalorder %s86, 0
      %s89 = sadd.s32 %s88, 1
      %s90 = scalar_select %p87, %s88, %s89
      %p93 = pneg %p87
      %p94 = scmp.eq.s32.totalorder %s18, 3
      %p95 = por %p93, %p94
      %p96 = scmp.ne.s32.totalorder %s88, %s91
      %p97 = scmp.eq.s32.totalorder %s18, 0
      %p98 = por %p96, %p97
      %p99 = scmp.ne.s32.totalorder %s88, %s91
      %p100 = scmp.eq.s32.totalorder %s23, 3
      %p101 = por %p99, %p100
      %p102 = scmp.ne.s32.totalorder %s91, %s92
      %p103 = scmp.eq.s32.totalorder %s23, 0
      %p104 = por %p102, %p103
      %p105 = scmp.ne.s32.totalorder %s91, %s92
      %p106 = scmp.eq.s32.totalorder %s24, 3
      %p107 = por %p105, %p106
      %p109 = scmp.ne.s32.totalorder %s92, %s108
      %p110 = scmp.eq.s32.totalorder %s24, 0
      %p111 = por %p109, %p110
      %s112 = ssub.s32 %s25, %s51
      %s113 = ssub.s32 %s27, %s43
      %s114 = sor.u32 %s112, %s113
      %p115 = scmp.eq.s32.totalorder %s114, 0
      %s117 = sadd.s32 %s116, 1
      %s118 = scalar_select %p115, %s116, %s117
      %p121 = pneg %p115
      %p122 = scmp.eq.s32.totalorder %s18, 3
      %p123 = por %p121, %p122
      %p124 = scmp.ne.s32.totalorder %s116, %s119
      %p125 = scmp.eq.s32.totalorder %s18, 0
      %p126 = por %p124, %p125
      %p127 = scmp.ne.s32.totalorder %s116, %s119
      %p128 = scmp.eq.s32.totalorder %s23, 3
      %p129 = por %p127, %p128
      %p130 = scmp.ne.s32.totalorder %s119, %s120
      %p131 = scmp.eq.s32.totalorder %s23, 0
      %p132 = por %p130, %p131
      %p133 = scmp.ne.s32.totalorder %s119, %s120
      %p134 = scmp.eq.s32.totalorder %s24, 3
      %p135 = por %p133, %p134
      %p137 = scmp.ne.s32.totalorder %s120, %s136
      %p138 = scmp.eq.s32.totalorder %s24, 0
      %p139 = por %p137, %p138
      %s140 = ssub.s32 %s25, %s51
      %s141 = ssub.s32 %s26, %s47
      %s142 = sor.u32 %s140, %s141
      %s143 = ssub.s32 %s27, %s43
      %s144 = sor.u32 %s142, %s143
      %p145 = scmp.eq.s32.totalorder %s144, 0
      %s147 = sadd.s32 %s146, 1
      %s148 = scalar_select %p145, %s146, %s147
      %p151 = pneg %p145
      %p152 = scmp.eq.s32.totalorder %s18, 3
      %p153 = por %p151, %p152
      %p154 = scmp.ne.s32.totalorder %s146, %s149
      %p155 = scmp.eq.s32.totalorder %s18, 0
      %p156 = por %p154, %p155
      %p157 = scmp.ne.s32.totalorder %s146, %s149
      %p158 = scmp.eq.s32.totalorder %s23, 3
      %p159 = por %p157, %p158
      %p160 = scmp.ne.s32.totalorder %s149, %s150
      %p161 = scmp.eq.s32.totalorder %s23, 0
      %p162 = por %p160, %p161
      %p163 = scmp.ne.s32.totalorder %s149, %s150
      %p164 = scmp.eq.s32.totalorder %s24, 3
      %p165 = por %p163, %p164
      %p167 = scmp.ne.s32.totalorder %s150, %s166
      %p168 = scmp.eq.s32.totalorder %s24, 0
      %p169 = por %p167, %p168
      %p170 = scmp.le.s32.totalorder 1, %s18
      %p171 = scmp.lt.s32.totalorder %s18, 5
      %p172 = pnand %p170, %p171
      %p173 = pneg %p172
      // Predicated region
      $region9: #{tpu_custom_call.1} parent=5 // pred_check
        _
      $region10: #{tpu_custom_call.1} parent=5 // pred_check_branch
        %175 = sbr.rel (%p172) target = $region12
      $region11: #{tpu_custom_call.1} parent=5 // pred_region
        %s176 = ssub.s32 %s18, 1
      $region12: #{tpu_custom_call.1} parent=5 // pred_fallthru
        _
      %p177 = scmp.lt.s32.totalorder %s18, 4
      // Predicated region
      $region13: #{tpu_custom_call.1} parent=5 // pred_check
        %p178 = pneg %p177
      $region14: #{tpu_custom_call.1} parent=5 // pred_check_branch
        %180 = sbr.rel (%p178) target = $region16
      $region15: #{tpu_custom_call.1} parent=5 // pred_region
        // Predicated region
        $region17: #{tpu_custom_call.1} parent=15 // pred_check
          %p181 = pneg %p68
        $region18: #{tpu_custom_call.1} parent=15 // pred_check_branch
          %183 = sbr.rel (%p181) target = $region20
        $region19: #{tpu_custom_call.1} parent=15 // pred_region
          %s184 = sand.u32 %s58, 1
          %s185 = scalar_lea.sflag [#allocation3], %s184
          %s186 = sand.u32 %s58, 1
          %s187 = smul.addr %s186, 8
          %s188 = scalar_lea.vmem [#allocation2], %s187
          %s190 = ssub.s32 128, 128
          %191 = vsyncadd %s185, %s190
          %s192 = sadd.s32 %s28, %s26
          %s193 = sadd.s32 %s192, %s25
          %s194 = smul.addr %s193, 128
          %s195 = scalar_lea.hbm %s0, %s194
          %s197 = sshll.u32 %s188, 4
          %s198 = int_to_ptr.vmem [resolvable:$true] %s197
          %200 = dma.hbm_to_vmem [thread:$0]  %s195, 128, %s198, %s185
        $region20: #{tpu_custom_call.1} parent=15 // pred_fallthru
          _
        // Predicated region
        $region21: #{tpu_custom_call.1} parent=15 // pred_check
          %p201 = pneg %p98
        $region22: #{tpu_custom_call.1} parent=15 // pred_check_branch
          %203 = sbr.rel (%p201) target = $region24
        $region23: #{tpu_custom_call.1} parent=15 // pred_region
          %s204 = sand.u32 %s18, 1
          %s205 = scalar_lea.sflag [#allocation6], %s204
          %s206 = sand.u32 %s88, 1
          %s207 = smul.addr %s206, 128
          %s208 = scalar_lea.vmem [#allocation5], %s207
          %s209 = smul.u32 16, %s28
          %s211 = ssub.s32 2048, 2048
          %212 = vsyncadd %s205, %s211
          %s213 = sadd.s32 %s27, %s209
          %s214 = smul.addr %s25, 16
          %s215 = sadd.s32 %s213, %s214
          %s216 = smul.addr %s215, 128
          %s217 = scalar_lea.hbm %s1, %s216
          %s218 = sshll.u32 %s208, 4
          %s219 = int_to_ptr.vmem [resolvable:$true] %s218
          %224 = dma.hbm_to_vmem [thread:$0]  %s217, 2048, %s219, %s205, 128, 128, 8
        $region24: #{tpu_custom_call.1} parent=15 // pred_fallthru
          _
        // Predicated region
        $region25: #{tpu_custom_call.1} parent=15 // pred_check
          %p225 = pneg %p126
        $region26: #{tpu_custom_call.1} parent=15 // pred_check_branch
          %227 = sbr.rel (%p225) target = $region28
        $region27: #{tpu_custom_call.1} parent=15 // pred_region
          %s228 = sand.u32 %s18, 1
          %s229 = scalar_lea.sflag [#allocation6], %s228
          %s230 = sand.u32 %s116, 1
          %s231 = scalar_lea.vmem [#allocation7], %s230
          %s233 = ssub.s32 16, 16
          %234 = vsyncadd %s229, %s233
          %s235 = sadd.s32 %s27, %s25
          %s236 = smul.addr %s235, 16
          %s237 = scalar_lea.hbm %s2, %s236
          %s239 = sshll.u32 %s231, 4
          %s240 = int_to_ptr.vmem [resolvable:$true] %s239
          %242 = dma.hbm_to_vmem [thread:$0]  %s237, 16, %s240, %s229
        $region28: #{tpu_custom_call.1} parent=15 // pred_fallthru
          _
      $region16: #{tpu_custom_call.1} parent=5 // pred_fallthru
        _
      %p243 = scmp.le.s32.totalorder 1, %s18
      %p244 = scmp.lt.s32.totalorder %s18, 5
      %p245 = pnand %p243, %p244
      %p246 = pneg %p245
      // Predicated region
      $region29: #{tpu_custom_call.1} parent=5 // pred_check
        _
      $region30: #{tpu_custom_call.1} parent=5 // pred_check_branch
        %248 = sbr.rel (%p245) target = $region32
      $region31: #{tpu_custom_call.1} parent=5 // pred_region
        %s249 = ssub.s32 %s18, 1
        %s250 = sand.u32 %s61, 1
        %s251 = scalar_lea.sflag [#allocation3], %s250
        %s252 = sand.u32 %s61, 1
        %s253 = smul.addr %s252, 8
        %s254 = scalar_lea.vmem [#allocation2], %s253
        // Predicated region
        $region33: #{tpu_custom_call.1} parent=31 // pred_check
          %p255 = pneg %p74
        $region34: #{tpu_custom_call.1} parent=31 // pred_check_branch
          %257 = sbr.rel (%p255) target = $region36
        $region35: #{tpu_custom_call.1} parent=31 // pred_region
          %258 = dma.done %s251, 128
        $region36: #{tpu_custom_call.1} parent=31 // pred_fallthru
          _
        %s259 = sand.u32 %s23, 1
        %s260 = scalar_lea.sflag [#allocation6], %s259
        %s261 = sand.u32 %s91, 1
        %s262 = smul.addr %s261, 128
        %s263 = scalar_lea.vmem [#allocation5], %s262
        // Predicated region
        $region37: #{tpu_custom_call.1} parent=31 // pred_check
          %p264 = pneg %p104
        $region38: #{tpu_custom_call.1} parent=31 // pred_check_branch
          %266 = sbr.rel (%p264) target = $region40
        $region39: #{tpu_custom_call.1} parent=31 // pred_region
          %267 = dma.done %s260, 2048
        $region40: #{tpu_custom_call.1} parent=31 // pred_fallthru
          _
        %s268 = sand.u32 %s23, 1
        %s269 = scalar_lea.sflag [#allocation6], %s268
        %s270 = sand.u32 %s119, 1
        %s271 = scalar_lea.vmem [#allocation7], %s270
        // Predicated region
        $region41: #{tpu_custom_call.1} parent=31 // pred_check
          %p272 = pneg %p132
        $region42: #{tpu_custom_call.1} parent=31 // pred_check_branch
          %274 = sbr.rel (%p272) target = $region44
        $region43: #{tpu_custom_call.1} parent=31 // pred_region
          %275 = dma.done %s269, 16
        $region44: #{tpu_custom_call.1} parent=31 // pred_fallthru
          _
        %s276 = sand.u32 %s61, 1
        %s277 = scalar_lea.sflag [#allocation3], %s276
        %s278 = sand.u32 %s61, 1
        %s279 = smul.addr %s278, 8
        %s280 = scalar_lea.vmem [#allocation2], %s279
        %p281 = pneg %p74
        %p282 = pneg %p71
        %s283 = sand.u32 %s23, 1
        %s284 = scalar_lea.sflag [#allocation6], %s283
        %s285 = sand.u32 %s91, 1
        %s286 = smul.addr %s285, 128
        %s287 = scalar_lea.vmem [#allocation5], %s286
        %p288 = pneg %p104
        %p289 = pneg %p101
        %s290 = sand.u32 %s23, 1
        %s291 = scalar_lea.sflag [#allocation6], %s290
        %s292 = sand.u32 %s119, 1
        %s293 = scalar_lea.vmem [#allocation7], %s292
        %p294 = pneg %p132
        %p295 = pneg %p129
        %p296 = pneg %p162
        %p297 = pneg %p159
        %s298 = sand.u32 %s149, 1
        %s299 = scalar_lea.sflag [#allocation4], %s298
        %s300 = sand.u32 %s149, 1
        %s301 = smul.addr %s300, 8
        %s302 = scalar_lea.vmem [#allocation8], %s301
        %s303 = smul.u32 16, %s32
        %v304 = vld [vmem:[%s254] sm:$0xff]
        %v305 = vld [vmem:[%s263] sm:$0xff]
        %v306 = vld [vmem:[%s263 + $0x8] sm:$0xff]
        %v307 = vld [vmem:[%s263 + $0x10] sm:$0xff]
        %v308 = vld [vmem:[%s263 + $0x18] sm:$0xff]
        %v309 = vld [vmem:[%s263 + $0x20] sm:$0xff]
        %v310 = vld [vmem:[%s263 + $0x28] sm:$0xff]
        %v311 = vld [vmem:[%s263 + $0x30] sm:$0xff]
        %v312 = vld [vmem:[%s263 + $0x38] sm:$0xff]
        %v313 = vld [vmem:[%s263 + $0x40] sm:$0xff]
        %v314 = vld [vmem:[%s263 + $0x48] sm:$0xff]
        %v315 = vld [vmem:[%s263 + $0x50] sm:$0xff]
        %v316 = vld [vmem:[%s263 + $0x58] sm:$0xff]
        %v317 = vld [vmem:[%s263 + $0x60] sm:$0xff]
        %v318 = vld [vmem:[%s263 + $0x68] sm:$0xff]
        %v319 = vld [vmem:[%s263 + $0x70] sm:$0xff]
        %v320 = vld [vmem:[%s263 + $0x78] sm:$0xff]
        %321 = vmatprep.subr.mxu0 0.0
        %322 = vmatpush1.msra.mxu0 %v305
        %323 = vmatprep.subr.mxu0 0.0
        %324 = vmatpush1.msra.mxu0 %v306
        %325 = vmatprep.subr.mxu0 0.0
        %326 = vmatpush1.msra.mxu0 %v307
        %327 = vmatprep.subr.mxu0 0.0
        %328 = vmatpush1.msra.mxu0 %v308
        %329 = vmatprep.subr.mxu0 0.0
        %330 = vmatpush1.msra.mxu0 %v309
        %331 = vmatprep.subr.mxu0 0.0
        %332 = vmatpush1.msra.mxu0 %v310
        %333 = vmatprep.subr.mxu0 0.0
        %334 = vmatpush1.msra.mxu0 %v311
        %335 = vmatprep.subr.mxu0 0.0
        %336 = vmatpush1.msra.mxu0 %v312
        %337 = vmatprep.subr.mxu0 0.0
        %338 = vmatpush1.msra.mxu0 %v313
        %339 = vmatprep.subr.mxu0 0.0
        %340 = vmatpush1.msra.mxu0 %v314
        %341 = vmatprep.subr.mxu0 0.0
        %342 = vmatpush1.msra.mxu0 %v315
        %343 = vmatprep.subr.mxu0 0.0
        %344 = vmatpush1.msra.mxu0 %v316
        %345 = vmatprep.subr.mxu0 0.0
        %346 = vmatpush1.msra.mxu0 %v317
        %347 = vmatprep.subr.mxu0 0.0
        %348 = vmatpush1.msra.mxu0 %v318
        %349 = vmatprep.subr.mxu0 0.0
        %350 = vmatpush1.msra.mxu0 %v319
        %351 = vmatprep.subr.mxu0 0.0
        %352 = vmatpush1.msra.mxu0 %v320
        %353 = vmatprep.subr.mxu0 0.0
        %354 = vmatpush1.msra.mxu0 0.0
        %355 = vmatprep.subr.mxu0 0.0
        %356 = vmatpush1.msra.mxu0 0.0
        %357 = vmatprep.subr.mxu0 0.0
        %358 = vmatpush1.msra.mxu0 0.0
        %359 = vmatprep.subr.mxu0 0.0
        %360 = vmatpush1.msra.mxu0 0.0
        %361 = vmatprep.subr.mxu0 0.0
        %362 = vmatpush1.msra.mxu0 0.0
        %363 = vmatprep.subr.mxu0 0.0
        %364 = vmatpush1.msra.mxu0 0.0
        %365 = vmatprep.subr.mxu0 0.0
        %366 = vmatpush1.msra.mxu0 0.0
        %367 = vmatprep.subr.mxu0 0.0
        %368 = vmatpush1.msra.mxu0 0.0
        %369 = vmatprep.subr.mxu0 0.0
        %370 = vmatpush1.msra.mxu0 0.0
        %371 = vmatprep.subr.mxu0 0.0
        %372 = vmatpush1.msra.mxu0 0.0
        %373 = vmatprep.subr.mxu0 0.0
        %374 = vmatpush1.msra.mxu0 0.0
        %375 = vmatprep.subr.mxu0 0.0
        %376 = vmatpush1.msra.mxu0 0.0
        %377 = vmatprep.subr.mxu0 0.0
        %378 = vmatpush1.msra.mxu0 0.0
        %379 = vmatprep.subr.mxu0 0.0
        %380 = vmatpush1.msra.mxu0 0.0
        %381 = vmatprep.subr.mxu0 0.0
        %382 = vmatpush1.msra.mxu0 0.0
        %383 = vmatprep.subr.mxu0 0.0
        %384 = vmatpush1.msra.mxu0 0.0
        %385 = vmatprep.mubr.f32.mxu0 0.0
        %386 = vmatmul.mubr.f32.gmra.mrb[0].mxu0 %v304
        %v387 = vpop.f32.mrb[0].mxu0
        %v388 = vadd.f32 0.0, %v387
        %v389 = vpop.f32.mrb[0].mxu0
        %390 = vdwg.mxu0
        %p391 = scmp.eq.s32.totalorder %s32, 0
        // Predicated region
        $region45: #{tpu_custom_call.1} parent=31 // pred_check
          %p392 = pneg %p391
        $region46: #{tpu_custom_call.1} parent=31 // pred_check_branch
          %394 = sbr.rel (%p392) target = $region48
        $region47: #{tpu_custom_call.1} parent=31 // pred_region
          %v395 = vld [vmem:[%s271] sm:$0x1]
          %v397 = vlaneseq
          %v398 = vshrl.u32 %v397, 7
          %v399 = vsub.s32 0, %v398
          %v400 = vrot.slane %v395, %v399
          %v402 = vadd.f32 %v388, %v400
          %403 = vst [vmem:[%s302] sm:$0xff] %v402
        $region48: #{tpu_custom_call.1} parent=31 // pred_fallthru
          _
        %p404 = scmp.ne.s32.totalorder %s32, 0
        // Predicated region
        $region49: #{tpu_custom_call.1} parent=31 // pred_check
          %p405 = pneg %p404
        $region50: #{tpu_custom_call.1} parent=31 // pred_check_branch
          %407 = sbr.rel (%p405) target = $region52
        $region51: #{tpu_custom_call.1} parent=31 // pred_region
          %v408 = vld [vmem:[%s302] sm:$0xff]
          %v409 = vadd.f32 %v408, %v388
          %410 = vst [vmem:[%s302] sm:$0xff] %v409
        $region52: #{tpu_custom_call.1} parent=31 // pred_fallthru
          _
        %s411 = sand.u32 %s149, 1
        %s412 = scalar_lea.sflag [#allocation4], %s411
        %s413 = sand.u32 %s149, 1
        %s414 = smul.addr %s413, 8
        %s415 = scalar_lea.vmem [#allocation8], %s414
        // Predicated region
        $region53: #{tpu_custom_call.1} parent=31 // pred_check
          %p416 = pneg %p159
        $region54: #{tpu_custom_call.1} parent=31 // pred_check_branch
          %418 = sbr.rel (%p416) target = $region56
        $region55: #{tpu_custom_call.1} parent=31 // pred_region
          %s420 = ssub.s32 128, 128
          %421 = vsyncadd %s412, %s420
          %s422 = sadd.s32 %s31, %s30
          %s423 = sadd.s32 %s422, %s29
          %s424 = smul.addr %s423, 128
          %s425 = scalar_lea.hbm %s3, %s424
          %s427 = sshll.u32 %s415, 4
          %s428 = int_to_ptr.vmem [resolvable:$true] %s427
          %430 = dma.vmem_to_hbm [thread:$0]  %s428, 128, %s425, %s412
        $region56: #{tpu_custom_call.1} parent=31 // pred_fallthru
          _
      $region32: #{tpu_custom_call.1} parent=5 // pred_fallthru
        _
      %p431 = scmp.le.s32.totalorder 2, %s18
      // Predicated region
      $region57: #{tpu_custom_call.1} parent=5 // pred_check
        %p432 = pneg %p431
      $region58: #{tpu_custom_call.1} parent=5 // pred_check_branch
        %434 = sbr.rel (%p432) target = $region60
      $region59: #{tpu_custom_call.1} parent=5 // pred_region
        %s435 = ssub.s32 %s18, 2
        // Predicated region
        $region61: #{tpu_custom_call.1} parent=59 // pred_check
          %p436 = pneg %p165
        $region62: #{tpu_custom_call.1} parent=59 // pred_check_branch
          %438 = sbr.rel (%p436) target = $region64
        $region63: #{tpu_custom_call.1} parent=59 // pred_region
          %s439 = sand.u32 %s150, 1
          %s440 = scalar_lea.sflag [#allocation4], %s439
          %s441 = sand.u32 %s150, 1
          %s442 = smul.addr %s441, 8
          %s443 = scalar_lea.vmem [#allocation8], %s442
          %444 = dma.done %s440, 128
        $region64: #{tpu_custom_call.1} parent=59 // pred_fallthru
          _
      $region60: #{tpu_custom_call.1} parent=5 // pred_fallthru
        _
    $region6: #{tpu_custom_call.1} parent=1 // loop_footer
      %s22 = sadd.s32 1, %s18
    $region7: #{tpu_custom_call.1} parent=1 // loop_footer_branch
      %17 = sbr.rel target = $region3
    $region8: #{tpu_custom_call.1} parent=1 // loop_exit
      _
    %445 = vsyncpa [#allocation3], 1
    %s446 = scalar_lea.sflag [#allocation3], 1
    %447 = vsyncpa %s446, 1
    %448 = vsyncpa [#allocation6], 1
    %s449 = scalar_lea.sflag [#allocation6], 1
    %450 = vsyncpa %s449, 1
    %451 = vsyncpa [#allocation4], 1
    %s452 = scalar_lea.sflag [#allocation4], 1
    %453 = vsyncpa %s452, 1

</llo_original>
